<compile_context>
chip_gen: v7x
topology: tpu7x:2x2x1
jax: 0.10.0
libtpu: 0.0.40
codegen_flags: <defaults>
</compile_context>

<pallas_src>
import jax
import jax.numpy as jnp
from jax.experimental import pallas as pl
from jax.experimental.pallas import tpu as pltpu


def _round_up(n, m):
    return ((n + m - 1) // m) * m


def _dummy_gen_kernel(x_ref, w1_ref, b1_ref, w2_ref, b2_ref, o_ref):
    # Layer 1: h = ReLU(x @ W1 + b1)  -- bf16 MXU operands, f32 accumulate.
    h = jnp.dot(x_ref[...], w1_ref[...], preferred_element_type=jnp.float32)
    h = jnp.maximum(h + b1_ref[...], 0.0)

    # Layer 2: y = Sigmoid(h @ W2 + b2)  -- 784-wide output (tail vreg masked).
    y = jnp.dot(h.astype(jnp.bfloat16), w2_ref[...],
                preferred_element_type=jnp.float32)
    y = y + b2_ref[...]
    # exp and the approximate reciprocal both run on the EUP slot, keeping the
    # VALU free (binding slot on v6e/v7x once the MXU work is this small).
    o_ref[...] = pl.reciprocal(1.0 + jnp.exp(-y), approx=True)


def dummy_gen_forward(z, labels, w1, b1, w2, b2, *, latent_dim):
    """z: (B, latent_dim) f32, labels: (B,) int32 in [0,10).
    Weights are stored transposed vs nn.Linear:
      w1: (latent_dim+10, 256), b1: (256,), w2: (256, 784), b2: (784,).
    Returns (B, 1, 28, 28) float32."""
    B = z.shape[0]
    K_in = latent_dim + 10
    K_pad = _round_up(K_in, 128)          # full-width MXU passes on K
    N_hid = 256
    N_out = 28 * 28                       # 784 == full output dim (no pad)

    # Batch tiling:
    #  * small B: one tile, rounded to 16 (bf16 sublane packing).
    #  * large B: tiles of up to 1024 rows, and always >= 2 tiles so the
    #    parallel batch axis can be split across v7x's two TensorCores.
    if B <= 512:
        TB = _round_up(max(B, 16), 16)
        n_tiles = 1
    else:
        n_tiles = max(2, (B + 1023) // 1024)
        TB = _round_up((B + n_tiles - 1) // n_tiles, 16)
    B_pad = TB * n_tiles

    # ---- wrapper-side data prep (one_hot + concat + zero-pad), bf16 cast ----
    one_hot = jax.nn.one_hot(labels, 10, dtype=jnp.float32)            # (B,10)
    x = jnp.concatenate([z.astype(jnp.float32), one_hot], axis=1)      # (B,K_in)
    x = jnp.pad(x, ((0, B_pad - B), (0, K_pad - K_in))).astype(jnp.bfloat16)

    w1p = jnp.pad(w1.astype(jnp.float32),
                  ((0, K_pad - K_in), (0, 0))).astype(jnp.bfloat16)    # (K_pad,256)
    w2p = w2.astype(jnp.bfloat16)                                      # (256,784)
    b1p = b1.reshape(1, N_hid).astype(jnp.float32)                     # (1,256)
    b2p = b2.reshape(1, N_out).astype(jnp.float32)                     # (1,784)

    cost = pl.CostEstimate(
        flops=2 * B_pad * K_pad * N_hid + 2 * B_pad * N_hid * N_out,
        transcendentals=B_pad * N_out,                                 # exp in sigmoid
        bytes_accessed=(x.size * 2 + w1p.size * 2 + w2p.size * 2
                        + b1p.size * 4 + b2p.size * 4 + B_pad * N_out * 4),
    )

    out = pl.pallas_call(
        _dummy_gen_kernel,
        out_shape=jax.ShapeDtypeStruct((B_pad, N_out), jnp.float32),
        grid=(n_tiles,),
        in_specs=[
            pl.BlockSpec((TB, K_pad), lambda i: (i, 0)),      # x: batch-tiled
            pl.BlockSpec((K_pad, N_hid), lambda i: (0, 0)),   # W1: resident
            pl.BlockSpec((1, N_hid), lambda i: (0, 0)),       # b1: resident
            pl.BlockSpec((N_hid, N_out), lambda i: (0, 0)),   # W2: resident
            pl.BlockSpec((1, N_out), lambda i: (0, 0)),       # b2: resident
        ],
        out_specs=pl.BlockSpec((TB, N_out), lambda i: (i, 0)),
        compiler_params=pltpu.CompilerParams(
            dimension_semantics=("parallel",),
            vmem_limit_bytes=32 * 1024 * 1024),   # large tiles fit on v5e too
        cost_estimate=cost,
    )(x, w1p, b1p, w2p, b2p)

    if B_pad != B:
        out = out[:B]                     # row-only slice; no column re-pack
    return out.reshape(B, 1, 28, 28)


def init_params(key, latent_dim):
    """Deterministic params (weights transposed relative to nn.Linear)."""
    k1, k2, k3, k4 = jax.random.split(key, 4)
    w1 = jax.random.normal(k1, (latent_dim + 10, 256), jnp.float32) * 0.02
    b1 = jax.random.normal(k2, (256,), jnp.float32) * 0.02
    w2 = jax.random.normal(k3, (256, 28 * 28), jnp.float32) * 0.02
    b2 = jax.random.normal(k4, (28 * 28,), jnp.float32) * 0.02
    return w1, b1, w2, b2


if __name__ == "__main__":
    key = jax.random.PRNGKey(0)
    k_z, k_l, k_p = jax.random.split(key, 3)

    B = 2
    latent_dim = 64
    z = jax.random.normal(k_z, (B, latent_dim), jnp.float32)
    labels = jax.random.randint(k_l, (B,), 0, 10, jnp.int32)
    w1, b1, w2, b2 = init_params(k_p, latent_dim)

    img = dummy_gen_forward(z, labels, w1, b1, w2, b2, latent_dim=latent_dim)
    jax.block_until_ready(img)

    # Sanity check against pure-JAX f32 reference (bf16 matmul operands and
    # approx reciprocal -> loosened tolerance; sigmoid output bounded in (0,1)).
    one_hot = jax.nn.one_hot(labels, 10, dtype=jnp.float32)
    x_ref = jnp.concatenate([z, one_hot], axis=1)
    h_ref = jnp.maximum(x_ref @ w1 + b1, 0.0)
    y_ref = jax.nn.sigmoid(h_ref @ w2 + b2).reshape(B, 1, 28, 28)

    assert img.shape == (B, 1, 28, 28)
    assert jnp.allclose(img, y_ref, atol=2e-2, rtol=2e-2), (
        float(jnp.max(jnp.abs(img - y_ref))))

    print("KERNEL_OK")
</pallas_src>

<mosaic_0001>
module attributes {stable_mosaic.version = 11 : i64} {
  func.func @_dummy_gen_kernel(%arg0: i32, %arg1: memref<16x128xbf16, #tpu.memory_space<vmem>>, %arg2: memref<128x256xbf16, #tpu.memory_space<vmem>>, %arg3: memref<1x256xf32, #tpu.memory_space<vmem>>, %arg4: memref<256x784xbf16, #tpu.memory_space<vmem>>, %arg5: memref<1x784xf32, #tpu.memory_space<vmem>>, %arg6: memref<16x784xf32, #tpu.memory_space<vmem>>) attributes {dimension_semantics = [#tpu.dimension_semantics<parallel>], iteration_bounds = array<i64: 1>, scalar_prefetch = 0 : i64, scratch_operands = 0 : i64, tpu.core_type = #tpu.core_type<tc>, window_params = [{transform_indices = @transform_0, window_bounds = array<i64: 16, 128>}, {pipeline_mode = #tpu.pipeline_mode<synchronous>, transform_indices = @transform_1, window_bounds = array<i64: 128, 256>}, {pipeline_mode = #tpu.pipeline_mode<synchronous>, transform_indices = @transform_2, window_bounds = array<i64: 1, 256>}, {pipeline_mode = #tpu.pipeline_mode<synchronous>, transform_indices = @transform_3, window_bounds = array<i64: 256, 784>}, {pipeline_mode = #tpu.pipeline_mode<synchronous>, transform_indices = @transform_4, window_bounds = array<i64: 1, 784>}, {transform_indices = @transform_5, window_bounds = array<i64: 16, 784>}]} {
    %c0 = arith.constant 0 : index
    %c0_0 = arith.constant 0 : index
    %0 = vector.load %arg1[%c0, %c0_0] : memref<16x128xbf16, #tpu.memory_space<vmem>>, vector<16x128xbf16>
    %c0_1 = arith.constant 0 : index
    %c0_2 = arith.constant 0 : index
    %1 = vector.load %arg2[%c0_1, %c0_2] : memref<128x256xbf16, #tpu.memory_space<vmem>>, vector<128x256xbf16>
    %cst = arith.constant dense<0.000000e+00> : vector<16x256xf32>
    %2 = tpu.matmul %0, %1, %cst {dimension_numbers = #tpu.dot_dimension_numbers<[1], [0], [0], [1], [0, 0, 1, 1], [], []>} : vector<16x128xbf16>, vector<128x256xbf16>, vector<16x256xf32> -> vector<16x256xf32>
    %c0_3 = arith.constant 0 : index
    %c0_4 = arith.constant 0 : index
    %3 = vector.load %arg3[%c0_3, %c0_4] : memref<1x256xf32, #tpu.memory_space<vmem>>, vector<1x256xf32>
    %4 = vector.broadcast %3 : vector<1x256xf32> to vector<16x256xf32>
    %5 = arith.addf %2, %4 : vector<16x256xf32>
    %cst_5 = arith.constant 0.000000e+00 : f32
    %6 = vector.broadcast %cst_5 : f32 to vector<16x256xf32>
    %7 = arith.maximumf %5, %6 : vector<16x256xf32>
    %8 = arith.truncf %7 : vector<16x256xf32> to vector<16x256xbf16>
    %c0_6 = arith.constant 0 : index
    %c0_7 = arith.constant 0 : index
    %9 = vector.load %arg4[%c0_6, %c0_7] : memref<256x784xbf16, #tpu.memory_space<vmem>>, vector<256x784xbf16>
    %cst_8 = arith.constant dense<0.000000e+00> : vector<16x784xf32>
    %10 = tpu.matmul %8, %9, %cst_8 {dimension_numbers = #tpu.dot_dimension_numbers<[1], [0], [0], [1], [0, 0, 1, 1], [], []>} : vector<16x256xbf16>, vector<256x784xbf16>, vector<16x784xf32> -> vector<16x784xf32>
    %c0_9 = arith.constant 0 : index
    %c0_10 = arith.constant 0 : index
    %11 = vector.load %arg5[%c0_9, %c0_10] : memref<1x784xf32, #tpu.memory_space<vmem>>, vector<1x784xf32>
    %12 = vector.broadcast %11 : vector<1x784xf32> to vector<16x784xf32>
    %13 = arith.addf %10, %12 : vector<16x784xf32>
    %cst_11 = arith.constant 0.000000e+00 : f32
    %14 = vector.broadcast %cst_11 : f32 to vector<16x784xf32>
    %15 = arith.subf %14, %13 : vector<16x784xf32>
    %16 = math.exp %15 : vector<16x784xf32>
    %cst_12 = arith.constant 1.000000e+00 : f32
    %17 = vector.broadcast %cst_12 : f32 to vector<16x784xf32>
    %18 = arith.addf %17, %16 : vector<16x784xf32>
    %19 = tpu.reciprocal %18 {approx = true} : vector<16x784xf32> -> vector<16x784xf32>
    %c0_13 = arith.constant 0 : index
    %c0_14 = arith.constant 0 : index
    %20 = vector.load %arg6[%c0_13, %c0_14] : memref<16x784xf32, #tpu.memory_space<vmem>>, vector<16x784xf32>
    tpu.vector_store %arg6[%c0_13, %c0_14], %19 {strides = array<i32>} : memref<16x784xf32, #tpu.memory_space<vmem>>, vector<16x784xf32>,
    return
  }
  func.func @transform_0(%arg0: i32) -> (i32, i32) {
    %c0_i32 = arith.constant 0 : i32
    %c0_i32_0 = arith.constant 0 : i32
    return %arg0, %c0_i32 : i32, i32
  }
  func.func @transform_1(%arg0: i32) -> (i32, i32) {
    %c0_i32 = arith.constant 0 : i32
    %c0_i32_0 = arith.constant 0 : i32
    %c0_i32_1 = arith.constant 0 : i32
    return %c0_i32, %c0_i32_0 : i32, i32
  }
  func.func @transform_2(%arg0: i32) -> (i32, i32) {
    %c0_i32 = arith.constant 0 : i32
    %c0_i32_0 = arith.constant 0 : i32
    %c0_i32_1 = arith.constant 0 : i32
    return %c0_i32, %c0_i32_0 : i32, i32
  }
  func.func @transform_3(%arg0: i32) -> (i32, i32) {
    %c0_i32 = arith.constant 0 : i32
    %c0_i32_0 = arith.constant 0 : i32
    %c0_i32_1 = arith.constant 0 : i32
    return %c0_i32, %c0_i32_0 : i32, i32
  }
  func.func @transform_4(%arg0: i32) -> (i32, i32) {
    %c0_i32 = arith.constant 0 : i32
    %c0_i32_0 = arith.constant 0 : i32
    %c0_i32_1 = arith.constant 0 : i32
    return %c0_i32, %c0_i32_0 : i32, i32
  }
  func.func @transform_5(%arg0: i32) -> (i32, i32) {
    %c0_i32 = arith.constant 0 : i32
    %c0_i32_0 = arith.constant 0 : i32
    return %arg0, %c0_i32 : i32, i32
  }
}

</mosaic_0001>

<llo_original>
// kernel: tpu_custom_call.1
$region0: #{tpu_custom_call.1}
  #allocation0 [shape = 'u32[]', space=smem, size = 0x4, offset = 0x4, fixed_abs, tag = 'smem constant byte address 0x4 - core index']
  #allocation1 [shape = 'u32[144,128]{1,0:T(1,128)}', space=vmem, size = 0x12000, scoped, tag = 'internal scratch']
  %s0 = inlined_call_operand.vmem [shape: bf16[16,128], index: 0, kind: input, shape index: {}]
  %s1 = inlined_call_operand.vmem [shape: bf16[128,256], index: 1, kind: input, shape index: {}]
  %s2 = inlined_call_operand.vmem [shape: f32[1,256], index: 2, kind: input, shape index: {}]
  %s3 = inlined_call_operand.vmem [shape: bf16[256,784], index: 3, kind: input, shape index: {}]
  %s4 = inlined_call_operand.vmem [shape: f32[1,784], index: 4, kind: input, shape index: {}]
  %s5 = inlined_call_operand.hbm [shape: f32[16,784], index: 5, kind: output, shape index: {}]
  %s6 = sld [smem:[#allocation0]]
  $region30: #{tpu_custom_call.1} parent=0
    _
  %s8 = ssub.s32 1, %s6
  %s9 = scalar_select 0, %s8, %s6
  $region1: #{tpu_custom_call.1} parent=0
    #allocation2 [shape = 'u8[57344]{0}', space=vmem, size = 0xe000, scoped, tag = 'output window, operand 0, single buffered']
    #allocation3 [shape = 's32[1]{0}', space=sflag, size = 0x4, scoped, tag = 'scoped memory for tpu_custom_call.1']
    %10 = vsyncpa [#allocation3], 0
    // Predicated region
    $region2: #{tpu_custom_call.1} parent=1 // pred_check
      _
    $region3: #{tpu_custom_call.1} parent=1 // pred_check_branch
      %12 = sbr.rel (0) target = $region5
    $region4: #{tpu_custom_call.1} parent=1 // pred_region
      _
    $region5: #{tpu_custom_call.1} parent=1 // pred_fallthru
      _
    // Predicated region
    $region6: #{tpu_custom_call.1} parent=1 // pred_check
      _
    $region7: #{tpu_custom_call.1} parent=1 // pred_check_branch
      %14 = sbr.rel (0) target = $region9
    $region8: #{tpu_custom_call.1} parent=1 // pred_region
      _
    $region9: #{tpu_custom_call.1} parent=1 // pred_fallthru
      _
    // Predicated region
    $region10: #{tpu_custom_call.1} parent=1 // pred_check
      _
    $region11: #{tpu_custom_call.1} parent=1 // pred_check_branch
      %16 = sbr.rel (0) target = $region13
    $region12: #{tpu_custom_call.1} parent=1 // pred_region
      _
    $region13: #{tpu_custom_call.1} parent=1 // pred_fallthru
      _
    // Predicated region
    $region14: #{tpu_custom_call.1} parent=1 // pred_check
      _
    $region15: #{tpu_custom_call.1} parent=1 // pred_check_branch
      %18 = sbr.rel (0) target = $region17
    $region16: #{tpu_custom_call.1} parent=1 // pred_region
      _
    $region17: #{tpu_custom_call.1} parent=1 // pred_fallthru
      _
    // Predicated region
    $region18: #{tpu_custom_call.1} parent=1 // pred_check
      _
    $region19: #{tpu_custom_call.1} parent=1 // pred_check_branch
      %20 = sbr.rel (0) target = $region21
    $region20: #{tpu_custom_call.1} parent=1 // pred_region
      _
    $region21: #{tpu_custom_call.1} parent=1 // pred_fallthru
      _
    %v22 = vld [vmem:[%s0] sm:$0xf]
    %v23 = vld [vmem:[%s0 + $0x4] sm:$0xf]
    %v24 = vld [vmem:[%s1] sm:$0xff]
    %v25 = vld [vmem:[%s1 + $0x8] sm:$0xff]
    %v26 = vld [vmem:[%s1 + $0x10] sm:$0xff]
    %v27 = vld [vmem:[%s1 + $0x18] sm:$0xff]
    %v28 = vld [vmem:[%s1 + $0x20] sm:$0xff]
    %v29 = vld [vmem:[%s1 + $0x28] sm:$0xff]
    %v30 = vld [vmem:[%s1 + $0x30] sm:$0xff]
    %v31 = vld [vmem:[%s1 + $0x38] sm:$0xff]
    %v32 = vld [vmem:[%s1 + $0x40] sm:$0xff]
    %v33 = vld [vmem:[%s1 + $0x48] sm:$0xff]
    %v34 = vld [vmem:[%s1 + $0x50] sm:$0xff]
    %v35 = vld [vmem:[%s1 + $0x58] sm:$0xff]
    %v36 = vld [vmem:[%s1 + $0x60] sm:$0xff]
    %v37 = vld [vmem:[%s1 + $0x68] sm:$0xff]
    %v38 = vld [vmem:[%s1 + $0x70] sm:$0xff]
    %v39 = vld [vmem:[%s1 + $0x78] sm:$0xff]
    %v40 = vld [vmem:[%s2] sm:$0x3]
    %v42 = vlaneseq
    %v43 = vshrl.u32 %v42, 7
    %v44 = vsub.s32 0, %v43
    %v45 = vrot.slane %v40, %v44
    %v46 = vlaneseq
    %v47 = vshrl.u32 %v46, 7
    %v48 = vsub.s32 1, %v47
    %v49 = vrot.slane %v40, %v48
    %v54 = vunpack.c.l.b16 %v22
    %v55 = vunpack.c.l.b16 %v23
    %v56 = vpack.c.b16 %v55, %v54
    %v74 = vunpack.c.l.b16 %v24
    %v75 = vunpack.c.h.b16 %v24
    %v76 = vunpack.c.l.b16 %v25
    %v77 = vunpack.c.h.b16 %v25
    %v78 = vunpack.c.l.b16 %v26
    %v79 = vunpack.c.h.b16 %v26
    %v80 = vunpack.c.l.b16 %v27
    %v81 = vunpack.c.h.b16 %v27
    %v82 = vunpack.c.l.b16 %v28
    %v83 = vunpack.c.h.b16 %v28
    %v84 = vunpack.c.l.b16 %v29
    %v85 = vunpack.c.h.b16 %v29
    %v86 = vunpack.c.l.b16 %v30
    %v87 = vunpack.c.h.b16 %v30
    %v88 = vunpack.c.l.b16 %v31
    %v89 = vunpack.c.h.b16 %v31
    %v90 = vunpack.c.l.b16 %v32
    %v91 = vunpack.c.h.b16 %v32
    %v92 = vunpack.c.l.b16 %v33
    %v93 = vunpack.c.h.b16 %v33
    %v94 = vunpack.c.l.b16 %v34
    %v95 = vunpack.c.h.b16 %v34
    %v96 = vunpack.c.l.b16 %v35
    %v97 = vunpack.c.h.b16 %v35
    %v98 = vunpack.c.l.b16 %v36
    %v99 = vunpack.c.h.b16 %v36
    %v100 = vunpack.c.l.b16 %v37
    %v101 = vunpack.c.h.b16 %v37
    %v102 = vunpack.c.l.b16 %v38
    %v103 = vunpack.c.h.b16 %v38
    %v104 = vunpack.c.l.b16 %v39
    %v105 = vunpack.c.h.b16 %v39
    %v106 = vpack.c.b16 %v76, %v74
    %v107 = vpack.c.b16 %v77, %v75
    %v108 = vpack.c.b16 %v80, %v78
    %v109 = vpack.c.b16 %v81, %v79
    %v110 = vpack.c.b16 %v84, %v82
    %v111 = vpack.c.b16 %v85, %v83
    %v112 = vpack.c.b16 %v88, %v86
    %v113 = vpack.c.b16 %v89, %v87
    %v114 = vpack.c.b16 %v92, %v90
    %v115 = vpack.c.b16 %v93, %v91
    %v116 = vpack.c.b16 %v96, %v94
    %v117 = vpack.c.b16 %v97, %v95
    %v118 = vpack.c.b16 %v100, %v98
    %v119 = vpack.c.b16 %v101, %v99
    %v120 = vpack.c.b16 %v104, %v102
    %v121 = vpack.c.b16 %v105, %v103
    %138 = vmatprep.subr.bf16.mxu0 %v107
    %139 = vmatpush1.bf16.msra.mxu0 %v106
    %140 = vmatprep.subr.bf16.mxu0 %v109
    %141 = vmatpush1.bf16.msra.mxu0 %v108
    %142 = vmatprep.subr.bf16.mxu0 %v111
    %143 = vmatpush1.bf16.msra.mxu0 %v110
    %144 = vmatprep.subr.bf16.mxu0 %v113
    %145 = vmatpush1.bf16.msra.mxu0 %v112
    %146 = vmatprep.subr.bf16.mxu0 %v115
    %147 = vmatpush1.bf16.msra.mxu0 %v114
    %148 = vmatprep.subr.bf16.mxu0 %v117
    %149 = vmatpush1.bf16.msra.mxu0 %v116
    %150 = vmatprep.subr.bf16.mxu0 %v119
    %151 = vmatpush1.bf16.msra.mxu0 %v118
    %152 = vmatprep.subr.bf16.mxu0 %v121
    %153 = vmatpush1.bf16.msra.mxu0 %v120
    %154 = vmatprep.subr.bf16.mxu0 0
    %155 = vmatpush1.bf16.msra.mxu0 0
    %156 = vmatprep.subr.bf16.mxu0 0
    %157 = vmatpush1.bf16.msra.mxu0 0
    %158 = vmatprep.subr.bf16.mxu0 0
    %159 = vmatpush1.bf16.msra.mxu0 0
    %160 = vmatprep.subr.bf16.mxu0 0
    %161 = vmatpush1.bf16.msra.mxu0 0
    %162 = vmatprep.subr.bf16.mxu0 0
    %163 = vmatpush1.bf16.msra.mxu0 0
    %164 = vmatprep.subr.bf16.mxu0 0
    %165 = vmatpush1.bf16.msra.mxu0 0
    %166 = vmatprep.subr.bf16.mxu0 0
    %167 = vmatpush1.bf16.msra.mxu0 0
    %168 = vmatprep.subr.bf16.mxu0 0
    %169 = vmatpush1.bf16.msra.mxu0 0
    %170 = vmatprep.mubr.bf16.mxu0 0
    %171 = vmatmul.mubr.bf16.gmra.mrb[0].mxu0 %v56
    %v172 = vpop.f32.mrb[0].mxu0
    %v173 = vadd.f32 %v45, %v172
    %v174 = vpop.f32.mrb[0].mxu0
    %v175 = vadd.f32 %v49, %v174
    %v176 = vpop.f32.mrb[0].mxu0
    %v177 = vadd.f32 %v45, %v176
    %v178 = vpop.f32.mrb[0].mxu0
    %v179 = vadd.f32 %v49, %v178
    %180 = vdwg.mxu0
    %v181 = vmax.f32 %v173, 0.0
    %v182 = vmax.f32 %v175, 0.0
    %v183 = vmax.f32 %v177, 0.0
    %v184 = vmax.f32 %v179, 0.0
    %v185 = vpack.c.bf16 %v183, %v181
    %v186 = vpack.c.bf16 %v184, %v182
    %v187 = vld [vmem:[%s3] sm:$0xff]
    %v188 = vld [vmem:[%s3 + $0x8] sm:$0xff]
    %v189 = vld [vmem:[%s3 + $0x10] sm:$0xff]
    %v190 = vld [vmem:[%s3 + $0x18] sm:$0xf]
    %v191 = vld [vmem:[%s3 + $0x1c] sm:$0xff]
    %v192 = vld [vmem:[%s3 + $0x24] sm:$0xff]
    %v193 = vld [vmem:[%s3 + $0x2c] sm:$0xff]
    %v194 = vld [vmem:[%s3 + $0x34] sm:$0xf]
    %v195 = vld [vmem:[%s3 + $0x38] sm:$0xff]
    %v196 = vld [vmem:[%s3 + $0x40] sm:$0xff]
    %v197 = vld [vmem:[%s3 + $0x48] sm:$0xff]
    %v198 = vld [vmem:[%s3 + $0x50] sm:$0xf]
    %v199 = vld [vmem:[%s3 + $0x54] sm:$0xff]
    %v200 = vld [vmem:[%s3 + $0x5c] sm:$0xff]
    %v201 = vld [vmem:[%s3 + $0x64] sm:$0xff]
    %v202 = vld [vmem:[%s3 + $0x6c] sm:$0xf]
    %v203 = vld [vmem:[%s3 + $0x70] sm:$0xff]
    %v204 = vld [vmem:[%s3 + $0x78] sm:$0xff]
    %v205 = vld [vmem:[%s3 + $0x80] sm:$0xff]
    %v206 = vld [vmem:[%s3 + $0x88] sm:$0xf]
    %v207 = vld [vmem:[%s3 + $0x8c] sm:$0xff]
    %v208 = vld [vmem:[%s3 + $0x94] sm:$0xff]
    %v209 = vld [vmem:[%s3 + $0x9c] sm:$0xff]
    %v210 = vld [vmem:[%s3 + $0xa4] sm:$0xf]
    %v211 = vld [vmem:[%s3 + $0xa8] sm:$0xff]
    %v212 = vld [vmem:[%s3 + $0xb0] sm:$0xff]
    %v213 = vld [vmem:[%s3 + $0xb8] sm:$0xff]
    %v214 = vld [vmem:[%s3 + $0xc0] sm:$0xf]
    %v215 = vld [vmem:[%s3 + $0xc4] sm:$0xff]
    %v216 = vld [vmem:[%s3 + $0xcc] sm:$0xff]
    %v217 = vld [vmem:[%s3 + $0xd4] sm:$0xff]
    %v218 = vld [vmem:[%s3 + $0xdc] sm:$0xf]
    %v219 = vld [vmem:[%s3 + $0xe0] sm:$0xff]
    %v220 = vld [vmem:[%s3 + $0xe8] sm:$0xff]
    %v221 = vld [vmem:[%s3 + $0xf0] sm:$0xff]
    %v222 = vld [vmem:[%s3 + $0xf8] sm:$0xf]
    %v223 = vld [vmem:[%s3 + $0xfc] sm:$0xff]
    %v224 = vld [vmem:[%s3 + $0x104] sm:$0xff]
    %v225 = vld [vmem:[%s3 + $0x10c] sm:$0xff]
    %v226 = vld [vmem:[%s3 + $0x114] sm:$0xf]
    %v227 = vld [vmem:[%s3 + $0x118] sm:$0xff]
    %v228 = vld [vmem:[%s3 + $0x120] sm:$0xff]
    %v229 = vld [vmem:[%s3 + $0x128] sm:$0xff]
    %v230 = vld [vmem:[%s3 + $0x130] sm:$0xf]
    %v231 = vld [vmem:[%s3 + $0x134] sm:$0xff]
    %v232 = vld [vmem:[%s3 + $0x13c] sm:$0xff]
    %v233 = vld [vmem:[%s3 + $0x144] sm:$0xff]
    %v234 = vld [vmem:[%s3 + $0x14c] sm:$0xf]
    %v235 = vld [vmem:[%s3 + $0x150] sm:$0xff]
    %v236 = vld [vmem:[%s3 + $0x158] sm:$0xff]
    %v237 = vld [vmem:[%s3 + $0x160] sm:$0xff]
    %v238 = vld [vmem:[%s3 + $0x168] sm:$0xf]
    %v239 = vld [vmem:[%s3 + $0x16c] sm:$0xff]
    %v240 = vld [vmem:[%s3 + $0x174] sm:$0xff]
    %v241 = vld [vmem:[%s3 + $0x17c] sm:$0xff]
    %v242 = vld [vmem:[%s3 + $0x184] sm:$0xf]
    %v243 = vld [vmem:[%s3 + $0x188] sm:$0xff]
    %v244 = vld [vmem:[%s3 + $0x190] sm:$0xff]
    %v245 = vld [vmem:[%s3 + $0x198] sm:$0xff]
    %v246 = vld [vmem:[%s3 + $0x1a0] sm:$0xf]
    %v247 = vld [vmem:[%s3 + $0x1a4] sm:$0xff]
    %v248 = vld [vmem:[%s3 + $0x1ac] sm:$0xff]
    %v249 = vld [vmem:[%s3 + $0x1b4] sm:$0xff]
    %v250 = vld [vmem:[%s3 + $0x1bc] sm:$0xf]
    %v251 = vld [vmem:[%s3 + $0x1c0] sm:$0xff]
    %v252 = vld [vmem:[%s3 + $0x1c8] sm:$0xff]
    %v253 = vld [vmem:[%s3 + $0x1d0] sm:$0xff]
    %v254 = vld [vmem:[%s3 + $0x1d8] sm:$0xf]
    %v255 = vld [vmem:[%s3 + $0x1dc] sm:$0xff]
    %v256 = vld [vmem:[%s3 + $0x1e4] sm:$0xff]
    %v257 = vld [vmem:[%s3 + $0x1ec] sm:$0xff]
    %v258 = vld [vmem:[%s3 + $0x1f4] sm:$0xf]
    %v259 = vld [vmem:[%s3 + $0x1f8] sm:$0xff]
    %v260 = vld [vmem:[%s3 + $0x200] sm:$0xff]
    %v261 = vld [vmem:[%s3 + $0x208] sm:$0xff]
    %v262 = vld [vmem:[%s3 + $0x210] sm:$0xf]
    %v263 = vld [vmem:[%s3 + $0x214] sm:$0xff]
    %v264 = vld [vmem:[%s3 + $0x21c] sm:$0xff]
    %v265 = vld [vmem:[%s3 + $0x224] sm:$0xff]
    %v266 = vld [vmem:[%s3 + $0x22c] sm:$0xf]
    %v267 = vld [vmem:[%s3 + $0x230] sm:$0xff]
    %v268 = vld [vmem:[%s3 + $0x238] sm:$0xff]
    %v269 = vld [vmem:[%s3 + $0x240] sm:$0xff]
    %v270 = vld [vmem:[%s3 + $0x248] sm:$0xf]
    %v271 = vld [vmem:[%s3 + $0x24c] sm:$0xff]
    %v272 = vld [vmem:[%s3 + $0x254] sm:$0xff]
    %v273 = vld [vmem:[%s3 + $0x25c] sm:$0xff]
    %v274 = vld [vmem:[%s3 + $0x264] sm:$0xf]
    %v275 = vld [vmem:[%s3 + $0x268] sm:$0xff]
    %v276 = vld [vmem:[%s3 + $0x270] sm:$0xff]
    %v277 = vld [vmem:[%s3 + $0x278] sm:$0xff]
    %v278 = vld [vmem:[%s3 + $0x280] sm:$0xf]
    %v279 = vld [vmem:[%s3 + $0x284] sm:$0xff]
    %v280 = vld [vmem:[%s3 + $0x28c] sm:$0xff]
    %v281 = vld [vmem:[%s3 + $0x294] sm:$0xff]
    %v282 = vld [vmem:[%s3 + $0x29c] sm:$0xf]
    %v283 = vld [vmem:[%s3 + $0x2a0] sm:$0xff]
    %v284 = vld [vmem:[%s3 + $0x2a8] sm:$0xff]
    %v285 = vld [vmem:[%s3 + $0x2b0] sm:$0xff]
    %v286 = vld [vmem:[%s3 + $0x2b8] sm:$0xf]
    %v287 = vld [vmem:[%s3 + $0x2bc] sm:$0xff]
    %v288 = vld [vmem:[%s3 + $0x2c4] sm:$0xff]
    %v289 = vld [vmem:[%s3 + $0x2cc] sm:$0xff]
    %v290 = vld [vmem:[%s3 + $0x2d4] sm:$0xf]
    %v291 = vld [vmem:[%s3 + $0x2d8] sm:$0xff]
    %v292 = vld [vmem:[%s3 + $0x2e0] sm:$0xff]
    %v293 = vld [vmem:[%s3 + $0x2e8] sm:$0xff]
    %v294 = vld [vmem:[%s3 + $0x2f0] sm:$0xf]
    %v295 = vld [vmem:[%s3 + $0x2f4] sm:$0xff]
    %v296 = vld [vmem:[%s3 + $0x2fc] sm:$0xff]
    %v297 = vld [vmem:[%s3 + $0x304] sm:$0xff]
    %v298 = vld [vmem:[%s3 + $0x30c] sm:$0xf]
    %v299 = vld [vmem:[%s3 + $0x310] sm:$0xff]
    %v300 = vld [vmem:[%s3 + $0x318] sm:$0xff]
    %v301 = vld [vmem:[%s3 + $0x320] sm:$0xff]
    %v302 = vld [vmem:[%s3 + $0x328] sm:$0xf]
    %v303 = vld [vmem:[%s3 + $0x32c] sm:$0xff]
    %v304 = vld [vmem:[%s3 + $0x334] sm:$0xff]
    %v305 = vld [vmem:[%s3 + $0x33c] sm:$0xff]
    %v306 = vld [vmem:[%s3 + $0x344] sm:$0xf]
    %v307 = vld [vmem:[%s3 + $0x348] sm:$0xff]
    %v308 = vld [vmem:[%s3 + $0x350] sm:$0xff]
    %v309 = vld [vmem:[%s3 + $0x358] sm:$0xff]
    %v310 = vld [vmem:[%s3 + $0x360] sm:$0xf]
    %v311 = vld [vmem:[%s3 + $0x364] sm:$0xff]
    %v312 = vld [vmem:[%s3 + $0x36c] sm:$0xff]
    %v313 = vld [vmem:[%s3 + $0x374] sm:$0xff]
    %v314 = vld [vmem:[%s3 + $0x37c] sm:$0xf]
    %v315 = vld [vmem:[%s4] sm:$0x7f]
    %v317 = vlaneseq
    %v318 = vshrl.u32 %v317, 7
    %v319 = vsub.s32 0, %v318
    %v320 = vrot.slane %v315, %v319
    %v321 = vlaneseq
    %v322 = vshrl.u32 %v321, 7
    %v323 = vsub.s32 1, %v322
    %v324 = vrot.slane %v315, %v323
    %v325 = vlaneseq
    %v326 = vshrl.u32 %v325, 7
    %v327 = vsub.s32 2, %v326
    %v328 = vrot.slane %v315, %v327
    %v329 = vlaneseq
    %v330 = vshrl.u32 %v329, 7
    %v331 = vsub.s32 3, %v330
    %v332 = vrot.slane %v315, %v331
    %v333 = vlaneseq
    %v334 = vshrl.u32 %v333, 7
    %v335 = vsub.s32 4, %v334
    %v336 = vrot.slane %v315, %v335
    %v337 = vlaneseq
    %v338 = vshrl.u32 %v337, 7
    %v339 = vsub.s32 5, %v338
    %v340 = vrot.slane %v315, %v339
    %v341 = vlaneseq
    %v342 = vshrl.u32 %v341, 7
    %v343 = vsub.s32 6, %v342
    %v344 = vrot.slane %v315, %v343
    %v480 = vunpack.c.l.b16 %v187
    %v481 = vunpack.c.h.b16 %v187
    %v482 = vunpack.c.l.b16 %v188
    %v483 = vunpack.c.h.b16 %v188
    %v484 = vunpack.c.l.b16 %v189
    %v485 = vunpack.c.h.b16 %v189
    %v486 = vunpack.c.l.b16 %v190
    %v487 = vunpack.c.l.b16 %v191
    %v488 = vunpack.c.h.b16 %v191
    %v489 = vunpack.c.l.b16 %v192
    %v490 = vunpack.c.h.b16 %v192
    %v491 = vunpack.c.l.b16 %v193
    %v492 = vunpack.c.h.b16 %v193
    %v493 = vunpack.c.l.b16 %v194
    %v494 = vunpack.c.l.b16 %v195
    %v495 = vunpack.c.h.b16 %v195
    %v496 = vunpack.c.l.b16 %v196
    %v497 = vunpack.c.h.b16 %v196
    %v498 = vunpack.c.l.b16 %v197
    %v499 = vunpack.c.h.b16 %v197
    %v500 = vunpack.c.l.b16 %v198
    %v501 = vunpack.c.l.b16 %v199
    %v502 = vunpack.c.h.b16 %v199
    %v503 = vunpack.c.l.b16 %v200
    %v504 = vunpack.c.h.b16 %v200
    %v505 = vunpack.c.l.b16 %v201
    %v506 = vunpack.c.h.b16 %v201
    %v507 = vunpack.c.l.b16 %v202
    %v508 = vunpack.c.l.b16 %v203
    %v509 = vunpack.c.h.b16 %v203
    %v510 = vunpack.c.l.b16 %v204
    %v511 = vunpack.c.h.b16 %v204
    %v512 = vunpack.c.l.b16 %v205
    %v513 = vunpack.c.h.b16 %v205
    %v514 = vunpack.c.l.b16 %v206
    %v515 = vunpack.c.l.b16 %v207
    %v516 = vunpack.c.h.b16 %v207
    %v517 = vunpack.c.l.b16 %v208
    %v518 = vunpack.c.h.b16 %v208
    %v519 = vunpack.c.l.b16 %v209
    %v520 = vunpack.c.h.b16 %v209
    %v521 = vunpack.c.l.b16 %v210
    %v522 = vunpack.c.l.b16 %v211
    %v523 = vunpack.c.h.b16 %v211
    %v524 = vunpack.c.l.b16 %v212
    %v525 = vunpack.c.h.b16 %v212
    %v526 = vunpack.c.l.b16 %v213
    %v527 = vunpack.c.h.b16 %v213
    %v528 = vunpack.c.l.b16 %v214
    %v529 = vunpack.c.l.b16 %v215
    %v530 = vunpack.c.h.b16 %v215
    %v531 = vunpack.c.l.b16 %v216
    %v532 = vunpack.c.h.b16 %v216
    %v533 = vunpack.c.l.b16 %v217
    %v534 = vunpack.c.h.b16 %v217
    %v535 = vunpack.c.l.b16 %v218
    %v536 = vunpack.c.l.b16 %v219
    %v537 = vunpack.c.h.b16 %v219
    %v538 = vunpack.c.l.b16 %v220
    %v539 = vunpack.c.h.b16 %v220
    %v540 = vunpack.c.l.b16 %v221
    %v541 = vunpack.c.h.b16 %v221
    %v542 = vunpack.c.l.b16 %v222
    %v543 = vunpack.c.l.b16 %v223
    %v544 = vunpack.c.h.b16 %v223
    %v545 = vunpack.c.l.b16 %v224
    %v546 = vunpack.c.h.b16 %v224
    %v547 = vunpack.c.l.b16 %v225
    %v548 = vunpack.c.h.b16 %v225
    %v549 = vunpack.c.l.b16 %v226
    %v550 = vunpack.c.l.b16 %v227
    %v551 = vunpack.c.h.b16 %v227
    %v552 = vunpack.c.l.b16 %v228
    %v553 = vunpack.c.h.b16 %v228
    %v554 = vunpack.c.l.b16 %v229
    %v555 = vunpack.c.h.b16 %v229
    %v556 = vunpack.c.l.b16 %v230
    %v557 = vunpack.c.l.b16 %v231
    %v558 = vunpack.c.h.b16 %v231
    %v559 = vunpack.c.l.b16 %v232
    %v560 = vunpack.c.h.b16 %v232
    %v561 = vunpack.c.l.b16 %v233
    %v562 = vunpack.c.h.b16 %v233
    %v563 = vunpack.c.l.b16 %v234
    %v564 = vunpack.c.l.b16 %v235
    %v565 = vunpack.c.h.b16 %v235
    %v566 = vunpack.c.l.b16 %v236
    %v567 = vunpack.c.h.b16 %v236
    %v568 = vunpack.c.l.b16 %v237
    %v569 = vunpack.c.h.b16 %v237
    %v570 = vunpack.c.l.b16 %v238
    %v571 = vunpack.c.l.b16 %v239
    %v572 = vunpack.c.h.b16 %v239
    %v573 = vunpack.c.l.b16 %v240
    %v574 = vunpack.c.h.b16 %v240
    %v575 = vunpack.c.l.b16 %v241
    %v576 = vunpack.c.h.b16 %v241
    %v577 = vunpack.c.l.b16 %v242
    %v578 = vunpack.c.l.b16 %v243
    %v579 = vunpack.c.h.b16 %v243
    %v580 = vunpack.c.l.b16 %v244
    %v581 = vunpack.c.h.b16 %v244
    %v582 = vunpack.c.l.b16 %v245
    %v583 = vunpack.c.h.b16 %v245
    %v584 = vunpack.c.l.b16 %v246
    %v585 = vunpack.c.l.b16 %v247
    %v586 = vunpack.c.h.b16 %v247
    %v587 = vunpack.c.l.b16 %v248
    %v588 = vunpack.c.h.b16 %v248
    %v589 = vunpack.c.l.b16 %v249
    %v590 = vunpack.c.h.b16 %v249
    %v591 = vunpack.c.l.b16 %v250
    %v592 = vunpack.c.l.b16 %v251
    %v593 = vunpack.c.h.b16 %v251
    %v594 = vunpack.c.l.b16 %v252
    %v595 = vunpack.c.h.b16 %v252
    %v596 = vunpack.c.l.b16 %v253
    %v597 = vunpack.c.h.b16 %v253
    %v598 = vunpack.c.l.b16 %v254
    %v599 = vunpack.c.l.b16 %v255
    %v600 = vunpack.c.h.b16 %v255
    %v601 = vunpack.c.l.b16 %v256
    %v602 = vunpack.c.h.b16 %v256
    %v603 = vunpack.c.l.b16 %v257
    %v604 = vunpack.c.h.b16 %v257
    %v605 = vunpack.c.l.b16 %v258
    %v606 = vunpack.c.l.b16 %v259
    %v607 = vunpack.c.h.b16 %v259
    %v608 = vunpack.c.l.b16 %v260
    %v609 = vunpack.c.h.b16 %v260
    %v610 = vunpack.c.l.b16 %v261
    %v611 = vunpack.c.h.b16 %v261
    %v612 = vunpack.c.l.b16 %v262
    %v613 = vunpack.c.l.b16 %v263
    %v614 = vunpack.c.h.b16 %v263
    %v615 = vunpack.c.l.b16 %v264
    %v616 = vunpack.c.h.b16 %v264
    %v617 = vunpack.c.l.b16 %v265
    %v618 = vunpack.c.h.b16 %v265
    %v619 = vunpack.c.l.b16 %v266
    %v620 = vunpack.c.l.b16 %v267
    %v621 = vunpack.c.h.b16 %v267
    %v622 = vunpack.c.l.b16 %v268
    %v623 = vunpack.c.h.b16 %v268
    %v624 = vunpack.c.l.b16 %v269
    %v625 = vunpack.c.h.b16 %v269
    %v626 = vunpack.c.l.b16 %v270
    %v627 = vunpack.c.l.b16 %v271
    %v628 = vunpack.c.h.b16 %v271
    %v629 = vunpack.c.l.b16 %v272
    %v630 = vunpack.c.h.b16 %v272
    %v631 = vunpack.c.l.b16 %v273
    %v632 = vunpack.c.h.b16 %v273
    %v633 = vunpack.c.l.b16 %v274
    %v634 = vunpack.c.l.b16 %v275
    %v635 = vunpack.c.h.b16 %v275
    %v636 = vunpack.c.l.b16 %v276
    %v637 = vunpack.c.h.b16 %v276
    %v638 = vunpack.c.l.b16 %v277
    %v639 = vunpack.c.h.b16 %v277
    %v640 = vunpack.c.l.b16 %v278
    %v641 = vunpack.c.l.b16 %v279
    %v642 = vunpack.c.h.b16 %v279
    %v643 = vunpack.c.l.b16 %v280
    %v644 = vunpack.c.h.b16 %v280
    %v645 = vunpack.c.l.b16 %v281
    %v646 = vunpack.c.h.b16 %v281
    %v647 = vunpack.c.l.b16 %v282
    %v648 = vunpack.c.l.b16 %v283
    %v649 = vunpack.c.h.b16 %v283
    %v650 = vunpack.c.l.b16 %v284
    %v651 = vunpack.c.h.b16 %v284
    %v652 = vunpack.c.l.b16 %v285
    %v653 = vunpack.c.h.b16 %v285
    %v654 = vunpack.c.l.b16 %v286
    %v655 = vunpack.c.l.b16 %v287
    %v656 = vunpack.c.h.b16 %v287
    %v657 = vunpack.c.l.b16 %v288
    %v658 = vunpack.c.h.b16 %v288
    %v659 = vunpack.c.l.b16 %v289
    %v660 = vunpack.c.h.b16 %v289
    %v661 = vunpack.c.l.b16 %v290
    %v662 = vunpack.c.l.b16 %v291
    %v663 = vunpack.c.h.b16 %v291
    %v664 = vunpack.c.l.b16 %v292
    %v665 = vunpack.c.h.b16 %v292
    %v666 = vunpack.c.l.b16 %v293
    %v667 = vunpack.c.h.b16 %v293
    %v668 = vunpack.c.l.b16 %v294
    %v669 = vunpack.c.l.b16 %v295
    %v670 = vunpack.c.h.b16 %v295
    %v671 = vunpack.c.l.b16 %v296
    %v672 = vunpack.c.h.b16 %v296
    %v673 = vunpack.c.l.b16 %v297
    %v674 = vunpack.c.h.b16 %v297
    %v675 = vunpack.c.l.b16 %v298
    %v676 = vunpack.c.l.b16 %v299
    %v677 = vunpack.c.h.b16 %v299
    %v678 = vunpack.c.l.b16 %v300
    %v679 = vunpack.c.h.b16 %v300
    %v680 = vunpack.c.l.b16 %v301
    %v681 = vunpack.c.h.b16 %v301
    %v682 = vunpack.c.l.b16 %v302
    %v683 = vunpack.c.l.b16 %v303
    %v684 = vunpack.c.h.b16 %v303
    %v685 = vunpack.c.l.b16 %v304
    %v686 = vunpack.c.h.b16 %v304
    %v687 = vunpack.c.l.b16 %v305
    %v688 = vunpack.c.h.b16 %v305
    %v689 = vunpack.c.l.b16 %v306
    %v690 = vunpack.c.l.b16 %v307
    %v691 = vunpack.c.h.b16 %v307
    %v692 = vunpack.c.l.b16 %v308
    %v693 = vunpack.c.h.b16 %v308
    %v694 = vunpack.c.l.b16 %v309
    %v695 = vunpack.c.h.b16 %v309
    %v696 = vunpack.c.l.b16 %v310
    %v697 = vunpack.c.l.b16 %v311
    %v698 = vunpack.c.h.b16 %v311
    %v699 = vunpack.c.l.b16 %v312
    %v700 = vunpack.c.h.b16 %v312
    %v701 = vunpack.c.l.b16 %v313
    %v702 = vunpack.c.h.b16 %v313
    %v703 = vunpack.c.l.b16 %v314
    %v704 = vpack.c.b16 %v487, %v480
    %v705 = vpack.c.b16 %v488, %v481
    %v706 = vpack.c.b16 %v489, %v482
    %v707 = vpack.c.b16 %v490, %v483
    %v708 = vpack.c.b16 %v491, %v484
    %v709 = vpack.c.b16 %v492, %v485
    %v710 = vpack.c.b16 %v493, %v486
    %v711 = vpack.c.b16 %v501, %v494
    %v712 = vpack.c.b16 %v502, %v495
    %v713 = vpack.c.b16 %v503, %v496
    %v714 = vpack.c.b16 %v504, %v497
    %v715 = vpack.c.b16 %v505, %v498
    %v716 = vpack.c.b16 %v506, %v499
    %v717 = vpack.c.b16 %v507, %v500
    %v718 = vpack.c.b16 %v515, %v508
    %v719 = vpack.c.b16 %v516, %v509
    %v720 = vpack.c.b16 %v517, %v510
    %v721 = vpack.c.b16 %v518, %v511
    %v722 = vpack.c.b16 %v519, %v512
    %v723 = vpack.c.b16 %v520, %v513
    %v724 = vpack.c.b16 %v521, %v514
    %v725 = vpack.c.b16 %v529, %v522
    %v726 = vpack.c.b16 %v530, %v523
    %v727 = vpack.c.b16 %v531, %v524
    %v728 = vpack.c.b16 %v532, %v525
    %v729 = vpack.c.b16 %v533, %v526
    %v730 = vpack.c.b16 %v534, %v527
    %v731 = vpack.c.b16 %v535, %v528
    %v732 = vpack.c.b16 %v543, %v536
    %v733 = vpack.c.b16 %v544, %v537
    %v734 = vpack.c.b16 %v545, %v538
    %v735 = vpack.c.b16 %v546, %v539
    %v736 = vpack.c.b16 %v547, %v540
    %v737 = vpack.c.b16 %v548, %v541
    %v738 = vpack.c.b16 %v549, %v542
    %v739 = vpack.c.b16 %v557, %v550
    %v740 = vpack.c.b16 %v558, %v551
    %v741 = vpack.c.b16 %v559, %v552
    %v742 = vpack.c.b16 %v560, %v553
    %v743 = vpack.c.b16 %v561, %v554
    %v744 = vpack.c.b16 %v562, %v555
    %v745 = vpack.c.b16 %v563, %v556
    %v746 = vpack.c.b16 %v571, %v564
    %v747 = vpack.c.b16 %v572, %v565
    %v748 = vpack.c.b16 %v573, %v566
    %v749 = vpack.c.b16 %v574, %v567
    %v750 = vpack.c.b16 %v575, %v568
    %v751 = vpack.c.b16 %v576, %v569
    %v752 = vpack.c.b16 %v577, %v570
    %v753 = vpack.c.b16 %v585, %v578
    %v754 = vpack.c.b16 %v586, %v579
    %v755 = vpack.c.b16 %v587, %v580
    %v756 = vpack.c.b16 %v588, %v581
    %v757 = vpack.c.b16 %v589, %v582
    %v758 = vpack.c.b16 %v590, %v583
    %v759 = vpack.c.b16 %v591, %v584
    %v760 = vpack.c.b16 %v599, %v592
    %v761 = vpack.c.b16 %v600, %v593
    %v762 = vpack.c.b16 %v601, %v594
    %v763 = vpack.c.b16 %v602, %v595
    %v764 = vpack.c.b16 %v603, %v596
    %v765 = vpack.c.b16 %v604, %v597
    %v766 = vpack.c.b16 %v605, %v598
    %v767 = vpack.c.b16 %v613, %v606
    %v768 = vpack.c.b16 %v614, %v607
    %v769 = vpack.c.b16 %v615, %v608
    %v770 = vpack.c.b16 %v616, %v609
    %v771 = vpack.c.b16 %v617, %v610
    %v772 = vpack.c.b16 %v618, %v611
    %v773 = vpack.c.b16 %v619, %v612
    %v774 = vpack.c.b16 %v627, %v620
    %v775 = vpack.c.b16 %v628, %v621
    %v776 = vpack.c.b16 %v629, %v622
    %v777 = vpack.c.b16 %v630, %v623
    %v778 = vpack.c.b16 %v631, %v624
    %v779 = vpack.c.b16 %v632, %v625
    %v780 = vpack.c.b16 %v633, %v626
    %v781 = vpack.c.b16 %v641, %v634
    %v782 = vpack.c.b16 %v642, %v635
    %v783 = vpack.c.b16 %v643, %v636
    %v784 = vpack.c.b16 %v644, %v637
    %v785 = vpack.c.b16 %v645, %v638
    %v786 = vpack.c.b16 %v646, %v639
    %v787 = vpack.c.b16 %v647, %v640
    %v788 = vpack.c.b16 %v655, %v648
    %v789 = vpack.c.b16 %v656, %v649
    %v790 = vpack.c.b16 %v657, %v650
    %v791 = vpack.c.b16 %v658, %v651
    %v792 = vpack.c.b16 %v659, %v652
    %v793 = vpack.c.b16 %v660, %v653
    %v794 = vpack.c.b16 %v661, %v654
    %v795 = vpack.c.b16 %v669, %v662
    %v796 = vpack.c.b16 %v670, %v663
    %v797 = vpack.c.b16 %v671, %v664
    %v798 = vpack.c.b16 %v672, %v665
    %v799 = vpack.c.b16 %v673, %v666
    %v800 = vpack.c.b16 %v674, %v667
    %v801 = vpack.c.b16 %v675, %v668
    %v802 = vpack.c.b16 %v683, %v676
    %v803 = vpack.c.b16 %v684, %v677
    %v804 = vpack.c.b16 %v685, %v678
    %v805 = vpack.c.b16 %v686, %v679
    %v806 = vpack.c.b16 %v687, %v680
    %v807 = vpack.c.b16 %v688, %v681
    %v808 = vpack.c.b16 %v689, %v682
    %v809 = vpack.c.b16 %v697, %v690
    %v810 = vpack.c.b16 %v698, %v691
    %v811 = vpack.c.b16 %v699, %v692
    %v812 = vpack.c.b16 %v700, %v693
    %v813 = vpack.c.b16 %v701, %v694
    %v814 = vpack.c.b16 %v702, %v695
    %v815 = vpack.c.b16 %v703, %v696
    %928 = vmatprep.subr.bf16.mxu0 %v705
    %929 = vmatpush1.bf16.msra.mxu0 %v704
    %930 = vmatprep.subr.bf16.mxu0 %v712
    %931 = vmatpush1.bf16.msra.mxu0 %v711
    %932 = vmatprep.subr.bf16.mxu0 %v719
    %933 = vmatpush1.bf16.msra.mxu0 %v718
    %934 = vmatprep.subr.bf16.mxu0 %v726
    %935 = vmatpush1.bf16.msra.mxu0 %v725
    %936 = vmatprep.subr.bf16.mxu0 %v733
    %937 = vmatpush1.bf16.msra.mxu0 %v732
    %938 = vmatprep.subr.bf16.mxu0 %v740
    %939 = vmatpush1.bf16.msra.mxu0 %v739
    %940 = vmatprep.subr.bf16.mxu0 %v747
    %941 = vmatpush1.bf16.msra.mxu0 %v746
    %942 = vmatprep.subr.bf16.mxu0 %v754
    %943 = vmatpush1.bf16.msra.mxu0 %v753
    %944 = vmatprep.subr.bf16.mxu0 %v761
    %945 = vmatpush1.bf16.msra.mxu0 %v760
    %946 = vmatprep.subr.bf16.mxu0 %v768
    %947 = vmatpush1.bf16.msra.mxu0 %v767
    %948 = vmatprep.subr.bf16.mxu0 %v775
    %949 = vmatpush1.bf16.msra.mxu0 %v774
    %950 = vmatprep.subr.bf16.mxu0 %v782
    %951 = vmatpush1.bf16.msra.mxu0 %v781
    %952 = vmatprep.subr.bf16.mxu0 %v789
    %953 = vmatpush1.bf16.msra.mxu0 %v788
    %954 = vmatprep.subr.bf16.mxu0 %v796
    %955 = vmatpush1.bf16.msra.mxu0 %v795
    %956 = vmatprep.subr.bf16.mxu0 %v803
    %957 = vmatpush1.bf16.msra.mxu0 %v802
    %958 = vmatprep.subr.bf16.mxu0 %v810
    %959 = vmatpush1.bf16.msra.mxu0 %v809
    %960 = vmatprep.mubr.bf16.mxu0 %v186
    %961 = vmatmul.mubr.bf16.gmra.mrb[0].mxu0 %v185
    %v962 = vpop.f32.mrb[0].mxu0
    %v963 = vadd.f32 %v320, %v962
    %v964 = vpop.f32.mrb[0].mxu0
    %v965 = vadd.f32 %v324, %v964
    %v966 = vpop.f32.mrb[0].mxu0
    %v967 = vadd.f32 %v320, %v966
    %v968 = vpop.f32.mrb[0].mxu0
    %v969 = vadd.f32 %v324, %v968
    %970 = vdwg.mxu0
    %971 = vmatprep.subr.bf16.mxu0 %v707
    %972 = vmatpush1.bf16.msra.mxu0 %v706
    %973 = vmatprep.subr.bf16.mxu0 %v714
    %974 = vmatpush1.bf16.msra.mxu0 %v713
    %975 = vmatprep.subr.bf16.mxu0 %v721
    %976 = vmatpush1.bf16.msra.mxu0 %v720
    %977 = vmatprep.subr.bf16.mxu0 %v728
    %978 = vmatpush1.bf16.msra.mxu0 %v727
    %979 = vmatprep.subr.bf16.mxu0 %v735
    %980 = vmatpush1.bf16.msra.mxu0 %v734
    %981 = vmatprep.subr.bf16.mxu0 %v742
    %982 = vmatpush1.bf16.msra.mxu0 %v741
    %983 = vmatprep.subr.bf16.mxu0 %v749
    %984 = vmatpush1.bf16.msra.mxu0 %v748
    %985 = vmatprep.subr.bf16.mxu0 %v756
    %986 = vmatpush1.bf16.msra.mxu0 %v755
    %987 = vmatprep.subr.bf16.mxu0 %v763
    %988 = vmatpush1.bf16.msra.mxu0 %v762
    %989 = vmatprep.subr.bf16.mxu0 %v770
    %990 = vmatpush1.bf16.msra.mxu0 %v769
    %991 = vmatprep.subr.bf16.mxu0 %v777
    %992 = vmatpush1.bf16.msra.mxu0 %v776
    %993 = vmatprep.subr.bf16.mxu0 %v784
    %994 = vmatpush1.bf16.msra.mxu0 %v783
    %995 = vmatprep.subr.bf16.mxu0 %v791
    %996 = vmatpush1.bf16.msra.mxu0 %v790
    %997 = vmatprep.subr.bf16.mxu0 %v798
    %998 = vmatpush1.bf16.msra.mxu0 %v797
    %999 = vmatprep.subr.bf16.mxu0 %v805
    %1000 = vmatpush1.bf16.msra.mxu0 %v804
    %1001 = vmatprep.subr.bf16.mxu0 %v812
    %1002 = vmatpush1.bf16.msra.mxu0 %v811
    %1003 = vmatprep.mubr.bf16.mxu0 %v186
    %1004 = vmatmul.mubr.bf16.gmra.mrb[0].mxu0 %v185
    %v1005 = vpop.f32.mrb[0].mxu0
    %v1006 = vadd.f32 %v328, %v1005
    %v1007 = vpop.f32.mrb[0].mxu0
    %v1008 = vadd.f32 %v332, %v1007
    %v1009 = vpop.f32.mrb[0].mxu0
    %v1010 = vadd.f32 %v328, %v1009
    %v1011 = vpop.f32.mrb[0].mxu0
    %v1012 = vadd.f32 %v332, %v1011
    %1013 = vdwg.mxu0
    %1014 = vmatprep.subr.bf16.mxu0 %v709
    %1015 = vmatpush1.bf16.msra.mxu0 %v708
    %1016 = vmatprep.subr.bf16.mxu0 %v716
    %1017 = vmatpush1.bf16.msra.mxu0 %v715
    %1018 = vmatprep.subr.bf16.mxu0 %v723
    %1019 = vmatpush1.bf16.msra.mxu0 %v722
    %1020 = vmatprep.subr.bf16.mxu0 %v730
    %1021 = vmatpush1.bf16.msra.mxu0 %v729
    %1022 = vmatprep.subr.bf16.mxu0 %v737
    %1023 = vmatpush1.bf16.msra.mxu0 %v736
    %1024 = vmatprep.subr.bf16.mxu0 %v744
    %1025 = vmatpush1.bf16.msra.mxu0 %v743
    %1026 = vmatprep.subr.bf16.mxu0 %v751
    %1027 = vmatpush1.bf16.msra.mxu0 %v750
    %1028 = vmatprep.subr.bf16.mxu0 %v758
    %1029 = vmatpush1.bf16.msra.mxu0 %v757
    %1030 = vmatprep.subr.bf16.mxu0 %v765
    %1031 = vmatpush1.bf16.msra.mxu0 %v764
    %1032 = vmatprep.subr.bf16.mxu0 %v772
    %1033 = vmatpush1.bf16.msra.mxu0 %v771
    %1034 = vmatprep.subr.bf16.mxu0 %v779
    %1035 = vmatpush1.bf16.msra.mxu0 %v778
    %1036 = vmatprep.subr.bf16.mxu0 %v786
    %1037 = vmatpush1.bf16.msra.mxu0 %v785
    %1038 = vmatprep.subr.bf16.mxu0 %v793
    %1039 = vmatpush1.bf16.msra.mxu0 %v792
    %1040 = vmatprep.subr.bf16.mxu0 %v800
    %1041 = vmatpush1.bf16.msra.mxu0 %v799
    %1042 = vmatprep.subr.bf16.mxu0 %v807
    %1043 = vmatpush1.bf16.msra.mxu0 %v806
    %1044 = vmatprep.subr.bf16.mxu0 %v814
    %1045 = vmatpush1.bf16.msra.mxu0 %v813
    %1046 = vmatprep.mubr.bf16.mxu0 %v186
    %1047 = vmatmul.mubr.bf16.gmra.mrb[0].mxu0 %v185
    %v1048 = vpop.f32.mrb[0].mxu0
    %v1049 = vadd.f32 %v336, %v1048
    %v1050 = vpop.f32.mrb[0].mxu0
    %v1051 = vadd.f32 %v340, %v1050
    %v1052 = vpop.f32.mrb[0].mxu0
    %v1053 = vadd.f32 %v336, %v1052
    %v1054 = vpop.f32.mrb[0].mxu0
    %v1055 = vadd.f32 %v340, %v1054
    %1056 = vdwg.mxu0
    %1057 = vmatprep.subr.bf16.mxu0 0
    %1058 = vmatpush1.bf16.msra.mxu0 %v710
    %1059 = vmatprep.subr.bf16.mxu0 0
    %1060 = vmatpush1.bf16.msra.mxu0 %v717
    %1061 = vmatprep.subr.bf16.mxu0 0
    %1062 = vmatpush1.bf16.msra.mxu0 %v724
    %1063 = vmatprep.subr.bf16.mxu0 0
    %1064 = vmatpush1.bf16.msra.mxu0 %v731
    %1065 = vmatprep.subr.bf16.mxu0 0
    %1066 = vmatpush1.bf16.msra.mxu0 %v738
    %1067 = vmatprep.subr.bf16.mxu0 0
    %1068 = vmatpush1.bf16.msra.mxu0 %v745
    %1069 = vmatprep.subr.bf16.mxu0 0
    %1070 = vmatpush1.bf16.msra.mxu0 %v752
    %1071 = vmatprep.subr.bf16.mxu0 0
    %1072 = vmatpush1.bf16.msra.mxu0 %v759
    %1073 = vmatprep.subr.bf16.mxu0 0
    %1074 = vmatpush1.bf16.msra.mxu0 %v766
    %1075 = vmatprep.subr.bf16.mxu0 0
    %1076 = vmatpush1.bf16.msra.mxu0 %v773
    %1077 = vmatprep.subr.bf16.mxu0 0
    %1078 = vmatpush1.bf16.msra.mxu0 %v780
    %1079 = vmatprep.subr.bf16.mxu0 0
    %1080 = vmatpush1.bf16.msra.mxu0 %v787
    %1081 = vmatprep.subr.bf16.mxu0 0
    %1082 = vmatpush1.bf16.msra.mxu0 %v794
    %1083 = vmatprep.subr.bf16.mxu0 0
    %1084 = vmatpush1.bf16.msra.mxu0 %v801
    %1085 = vmatprep.subr.bf16.mxu0 0
    %1086 = vmatpush1.bf16.msra.mxu0 %v808
    %1087 = vmatprep.subr.bf16.mxu0 0
    %1088 = vmatpush1.bf16.msra.mxu0 %v815
    %1089 = vmatprep.mubr.bf16.mxu0 %v186
    %1090 = vmatmul.mubr.bf16.gmra.mrb[0].mxu0 %v185
    %v1091 = vpop.f32.mrb[0].mxu0
    %v1092 = vadd.f32 %v344, %v1091
    %v1093 = vpop.f32.mrb[0].mxu0
    %v1094 = vpop.f32.mrb[0].mxu0
    %v1095 = vadd.f32 %v344, %v1094
    %v1096 = vpop.f32.mrb[0].mxu0
    %1097 = vdwg.mxu0
    %v1098 = vsub.f32 0.0, %v963
    %v1099 = vsub.f32 0.0, %v965
    %v1100 = vsub.f32 0.0, %v1006
    %v1101 = vsub.f32 0.0, %v1008
    %v1102 = vsub.f32 0.0, %v1049
    %v1103 = vsub.f32 0.0, %v1051
    %v1104 = vsub.f32 0.0, %v1092
    %v1105 = vsub.f32 0.0, %v967
    %v1106 = vsub.f32 0.0, %v969
    %v1107 = vsub.f32 0.0, %v1010
    %v1108 = vsub.f32 0.0, %v1012
    %v1109 = vsub.f32 0.0, %v1053
    %v1110 = vsub.f32 0.0, %v1055
    %v1111 = vsub.f32 0.0, %v1095
    %v1112 = vmul.f32 %v1098, 1.442695
    %v1113 = vpow.pop %v1112
    %v1114 = vmul.f32 %v1099, 1.442695
    %v1115 = vpow.pop %v1114
    %v1116 = vmul.f32 %v1100, 1.442695
    %v1117 = vpow.pop %v1116
    %v1118 = vmul.f32 %v1101, 1.442695
    %v1119 = vpow.pop %v1118
    %v1120 = vmul.f32 %v1102, 1.442695
    %v1121 = vpow.pop %v1120
    %v1122 = vmul.f32 %v1103, 1.442695
    %v1123 = vpow.pop %v1122
    %v1124 = vmul.f32 %v1104, 1.442695
    %v1125 = vpow.pop %v1124
    %v1126 = vmul.f32 %v1105, 1.442695
    %v1127 = vpow.pop %v1126
    %v1128 = vmul.f32 %v1106, 1.442695
    %v1129 = vpow.pop %v1128
    %v1130 = vmul.f32 %v1107, 1.442695
    %v1131 = vpow.pop %v1130
    %v1132 = vmul.f32 %v1108, 1.442695
    %v1133 = vpow.pop %v1132
    %v1134 = vmul.f32 %v1109, 1.442695
    %v1135 = vpow.pop %v1134
    %v1136 = vmul.f32 %v1110, 1.442695
    %v1137 = vpow.pop %v1136
    %v1138 = vmul.f32 %v1111, 1.442695
    %v1139 = vpow.pop %v1138
    %v1140 = vadd.f32 %v1113, 1.0
    %v1141 = vadd.f32 %v1115, 1.0
    %v1142 = vadd.f32 %v1117, 1.0
    %v1143 = vadd.f32 %v1119, 1.0
    %v1144 = vadd.f32 %v1121, 1.0
    %v1145 = vadd.f32 %v1123, 1.0
    %v1146 = vadd.f32 %v1125, 1.0
    %v1147 = vadd.f32 %v1127, 1.0
    %v1148 = vadd.f32 %v1129, 1.0
    %v1149 = vadd.f32 %v1131, 1.0
    %v1150 = vadd.f32 %v1133, 1.0
    %v1151 = vadd.f32 %v1135, 1.0
    %v1152 = vadd.f32 %v1137, 1.0
    %v1153 = vadd.f32 %v1139, 1.0
    %v1154 = vrcp.pop %v1140
    %v1155 = vrcp.pop %v1141
    %v1156 = vrcp.pop %v1142
    %v1157 = vrcp.pop %v1143
    %v1158 = vrcp.pop %v1144
    %v1159 = vrcp.pop %v1145
    %v1160 = vrcp.pop %v1146
    %v1161 = vrcp.pop %v1147
    %v1162 = vrcp.pop %v1148
    %v1163 = vrcp.pop %v1149
    %v1164 = vrcp.pop %v1150
    %v1165 = vrcp.pop %v1151
    %v1166 = vrcp.pop %v1152
    %v1167 = vrcp.pop %v1153
    %1168 = vst [vmem:[#allocation2] sm:$0xff] %v1154
    %1169 = vst [vmem:[#allocation2 + $0x8] sm:$0xff] %v1155
    %1170 = vst [vmem:[#allocation2 + $0x10] sm:$0xff] %v1156
    %1171 = vst [vmem:[#allocation2 + $0x18] sm:$0xff] %v1157
    %1172 = vst [vmem:[#allocation2 + $0x20] sm:$0xff] %v1158
    %1173 = vst [vmem:[#allocation2 + $0x28] sm:$0xff] %v1159
    %vm1174 = vcmask 130048
    %1175 = vst.msk [vmem:[#allocation2 + $0x30] sm:$0xff] %vm1174, %v1160
    %1176 = vst [vmem:[#allocation2 + $0x38] sm:$0xff] %v1161
    %1177 = vst [vmem:[#allocation2 + $0x40] sm:$0xff] %v1162
    %1178 = vst [vmem:[#allocation2 + $0x48] sm:$0xff] %v1163
    %1179 = vst [vmem:[#allocation2 + $0x50] sm:$0xff] %v1164
    %1180 = vst [vmem:[#allocation2 + $0x58] sm:$0xff] %v1165
    %1181 = vst [vmem:[#allocation2 + $0x60] sm:$0xff] %v1166
    %1182 = vst.msk [vmem:[#allocation2 + $0x68] sm:$0xff] %vm1174, %v1167
    // Predicated region
    $region22: #{tpu_custom_call.1} parent=1 // pred_check
      _
    $region23: #{tpu_custom_call.1} parent=1 // pred_check_branch
      %1184 = sbr.rel (0) target = $region25
    $region24: #{tpu_custom_call.1} parent=1 // pred_region
      %s1186 = ssub.s32 1792, 1792
      %1187 = vsyncadd [#allocation3], %s1186
      %s1188 = sshll.u32 [#allocation2], 4
      %s1189 = int_to_ptr.vmem [resolvable:$true] %s1188
      %1194 = dma.vmem_to_hbm [thread:$0]  %s1189, 1792, %s5, [#allocation3], 896, 896, 56
    $region25: #{tpu_custom_call.1} parent=1 // pred_fallthru
      _
    // Predicated region
    $region26: #{tpu_custom_call.1} parent=1 // pred_check
      _
    $region27: #{tpu_custom_call.1} parent=1 // pred_check_branch
      %1196 = sbr.rel (0) target = $region29
    $region28: #{tpu_custom_call.1} parent=1 // pred_region
      %1197 = dma.done [#allocation3], 1792
    $region29: #{tpu_custom_call.1} parent=1 // pred_fallthru
      _
    %1198 = vsyncpa [#allocation3], 1

</llo_original>
